<compile_context>
chip_gen: v7x
topology: tpu7x:2x2x1
jax: 0.10.0
libtpu: 0.0.40
codegen_flags: <defaults>
</compile_context>

<pallas_src>
import jax
import jax.numpy as jnp
from jax.experimental import pallas as pl
from jax.experimental.pallas import tpu as pltpu

_EPS = 1e-5


# --------------------------------------------------------------------------
# Kernel 1: fused  relu(bn1(x)) @ W1  followed by relu(bn2(.))
# Input block is an NCHW image slab (1, Cin, H*W); the channel->lane
# transpose happens in VMEM.  Output `a` is channel-last (1, H*W, Cmid) bf16.
# --------------------------------------------------------------------------
def _bn_relu_conv1x1_bn_relu_kernel(x_ref, w1_ref, s1_ref, b1_ref,
                                    s2_ref, b2_ref, a_ref):
    x = x_ref[0].astype(jnp.float32)                     # (Cin, HW)
    xt = x.T                                             # (HW, Cin): channels on lanes
    h = jnp.maximum(xt * s1_ref[...] + b1_ref[...], 0.0)
    y = jnp.dot(h.astype(w1_ref.dtype), w1_ref[...],
                preferred_element_type=jnp.float32)      # (HW, Cmid) f32 acc
    y = jnp.maximum(y * s2_ref[...] + b2_ref[...], 0.0)
    a_ref[0, :, :] = y.astype(a_ref.dtype)


# --------------------------------------------------------------------------
# Kernel 2: fused 3x3 conv (halo built in VMEM) + bn3 + relu + expanding 1x1
# conv + residual add, written directly as NCHW rows.
# --------------------------------------------------------------------------
def _conv3x3_bn_relu_conv1x1_residual_kernel(a_ref, x_ref, w2_ref, s3_ref,
                                             b3_ref, w3_ref, o_ref, band_ref):
    # a_ref : (1, H*W, Cmid) bf16, full image, resident across the row-block axis
    # x_ref : (1, Cout, ROWS, W) residual block (NCHW)
    # w2_ref: (9, Cmid, Cmid) bf16   s3/b3: (1, Cmid) f32   w3_ref: (Cmid, Cout) bf16
    # o_ref : (1, Cout, ROWS, W)     band_ref: VMEM (ROWS+2, W+2, Cmid) bf16
    cout = o_ref.shape[1]
    rows = o_ref.shape[2]
    w = o_ref.shape[3]
    cmid = w2_ref.shape[-1]
    m = rows * w

    rb = pl.program_id(1)
    nrb = pl.num_programs(1)
    h0 = rb * rows

    # ---- build the zero-padded band: halo ring first, then body rows ----
    band_ref[0:1, :, :] = jnp.zeros((1, w + 2, cmid), band_ref.dtype)
    band_ref[rows + 1:rows + 2, :, :] = jnp.zeros((1, w + 2, cmid), band_ref.dtype)
    band_ref[:, 0:1, :] = jnp.zeros((rows + 2, 1, cmid), band_ref.dtype)
    band_ref[:, w + 1:w + 2, :] = jnp.zeros((rows + 2, 1, cmid), band_ref.dtype)

    body = a_ref[0, pl.ds(h0 * w, m), :]                 # (ROWS*W, Cmid)
    band_ref[1:rows + 1, 1:w + 1, :] = body.reshape(rows, w, cmid)

    @pl.when(rb > 0)
    def _():
        top = a_ref[0, pl.ds((h0 - 1) * w, w), :]        # (W, Cmid)
        band_ref[0:1, 1:w + 1, :] = top.reshape(1, w, cmid)

    @pl.when(rb < nrb - 1)
    def _():
        bot = a_ref[0, pl.ds((h0 + rows) * w, w), :]
        band_ref[rows + 1:rows + 2, 1:w + 1, :] = bot.reshape(1, w, cmid)

    # ---- 3x3 conv: nine shifted (M, Cmid) x (Cmid, Cmid) matmuls, f32 acc ----
    acc = jnp.zeros((m, cmid), jnp.float32)
    for kh in range(3):
        for kw in range(3):
            patch = band_ref[kh:kh + rows, kw:kw + w, :].reshape(m, cmid)
            acc = acc + jnp.dot(patch, w2_ref[kh * 3 + kw],
                                preferred_element_type=jnp.float32)

    # ---- bn3 + relu, then expanding 1x1 conv (b never goes to HBM) ----
    bact = jnp.maximum(acc * s3_ref[...] + b3_ref[...], 0.0)
    y = jnp.dot(bact.astype(w3_ref.dtype), w3_ref[...],
                preferred_element_type=jnp.float32)      # (M, Cout)

    # ---- residual add + store, directly in NCHW (no wrapper transpose) ----
    for i in range(rows):
        row = y[i * w:(i + 1) * w, :].T                  # (Cout, W)
        res = x_ref[0, :, i, :].astype(jnp.float32)      # (Cout, W)
        o_ref[0, :, i, :] = (row + res).astype(o_ref.dtype)


# --------------------------------------------------------------------------
# Wrapper helpers
# --------------------------------------------------------------------------
def _fold_bn(gamma, beta, mean, var, eps=_EPS):
    scale = gamma / jnp.sqrt(var + eps)
    shift = beta - mean * scale
    return (scale.reshape(1, -1).astype(jnp.float32),
            shift.reshape(1, -1).astype(jnp.float32))


def _pick_rows(h):
    # Row-block height: multiple of 8 (sublane rule) dividing H, else whole H.
    return 8 if h % 8 == 0 else h


def bottleneck_forward(x_nchw, params, stride=1, compute_dtype=jnp.bfloat16):
    """Pre-activation Bottleneck forward (inference-mode BatchNorm), NCHW in/out.

    Only the identity-shortcut path (downsample=None) is supported, which
    requires stride == 1 and inplanes == 4 * planes.
    """
    # TODO(synk): downsample (projection shortcut) submodule not implemented.
    n, cin, h, w = x_nchw.shape
    planes = params["w1"].shape[0]
    cout = params["w3"].shape[0]
    assert stride == 1 and cin == cout, \
        "identity shortcut requires stride=1 and inplanes == 4*planes"

    dtype = x_nchw.dtype
    hw = h * w

    # Fold BNs (inference mode) into per-channel scale/shift.
    s1, b1 = _fold_bn(*params["bn1"])
    s2, b2 = _fold_bn(*params["bn2"])
    s3, b3 = _fold_bn(*params["bn3"])

    # Matmul-friendly, bf16 weights (MXU operands); f32 accumulation in kernels.
    w1_m = jnp.transpose(params["w1"][:, :, 0, 0], (1, 0)).astype(compute_dtype)  # (Cin, planes)
    w2_m = jnp.transpose(params["w2"], (2, 3, 1, 0)).reshape(
        9, planes, planes).astype(compute_dtype)                                   # (9, planes, planes)
    w3_m = jnp.transpose(params["w3"][:, :, 0, 0], (1, 0)).astype(compute_dtype)  # (planes, 4*planes)

    # Free, contiguity-preserving view of the NCHW input.
    x3 = x_nchw.reshape(n, cin, hw)

    # ---- Stage 1: a = relu(bn2(conv1(relu(bn1(x)))))  -> (n, hw, planes) bf16 ----
    a = pl.pallas_call(
        _bn_relu_conv1x1_bn_relu_kernel,
        out_shape=jax.ShapeDtypeStruct((n, hw, planes), compute_dtype),
        grid=(n,),
        in_specs=[
            pl.BlockSpec((1, cin, hw), lambda i: (i, 0, 0)),
            pl.BlockSpec((cin, planes), lambda i: (0, 0)),
            pl.BlockSpec((1, cin), lambda i: (0, 0)),
            pl.BlockSpec((1, cin), lambda i: (0, 0)),
            pl.BlockSpec((1, planes), lambda i: (0, 0)),
            pl.BlockSpec((1, planes), lambda i: (0, 0)),
        ],
        out_specs=pl.BlockSpec((1, hw, planes), lambda i: (i, 0, 0)),
        compiler_params=pltpu.CompilerParams(dimension_semantics=("parallel",)),
    )(x3, w1_m, s1, b1, s2, b2)

    # ---- Stage 2+3 fused: out = conv3(relu(bn3(conv2(a)))) + x, NCHW output ----
    rows = _pick_rows(h)
    n_rb = h // rows
    out = pl.pallas_call(
        _conv3x3_bn_relu_conv1x1_residual_kernel,
        out_shape=jax.ShapeDtypeStruct((n, cout, h, w), dtype),
        grid=(n, n_rb),
        in_specs=[
            pl.BlockSpec((1, hw, planes), lambda i, j: (i, 0, 0)),       # a (resident per image)
            pl.BlockSpec((1, cout, rows, w), lambda i, j: (i, 0, j, 0)),  # residual rows
            pl.BlockSpec((9, planes, planes), lambda i, j: (0, 0, 0)),
            pl.BlockSpec((1, planes), lambda i, j: (0, 0)),
            pl.BlockSpec((1, planes), lambda i, j: (0, 0)),
            pl.BlockSpec((planes, cout), lambda i, j: (0, 0)),
        ],
        out_specs=pl.BlockSpec((1, cout, rows, w), lambda i, j: (i, 0, j, 0)),
        scratch_shapes=[pltpu.VMEM((rows + 2, w + 2, planes), compute_dtype)],
        compiler_params=pltpu.CompilerParams(
            dimension_semantics=("parallel", "parallel")),
    )(a, x_nchw, w2_m, s3, b3, w3_m)

    return out


# --------------------------------------------------------------------------
# Pure-JAX reference (mirrors the PyTorch module, eval-mode BN).
# --------------------------------------------------------------------------
def _bottleneck_ref(x, params, stride=1, eps=_EPS):
    def bn(t, g, b, m, v):
        g, b, m, v = (p[None, :, None, None] for p in (g, b, m, v))
        return (t - m) / jnp.sqrt(v + eps) * g + b

    def conv(t, wgt, s=1, p=0):
        return jax.lax.conv_general_dilated(
            t, wgt, window_strides=(s, s), padding=[(p, p), (p, p)],
            dimension_numbers=("NCHW", "OIHW", "NCHW"))

    out = jnp.maximum(bn(x, *params["bn1"]), 0.0)
    out = conv(out, params["w1"])
    out = jnp.maximum(bn(out, *params["bn2"]), 0.0)
    out = conv(out, params["w2"], s=stride, p=1)
    out = jnp.maximum(bn(out, *params["bn3"]), 0.0)
    out = conv(out, params["w3"])
    return out + x


if __name__ == "__main__":
    key = jax.random.PRNGKey(0)
    keys = jax.random.split(key, 8)

    planes = 16
    inplanes = planes * 4          # identity shortcut requires inplanes == 4*planes
    N, H, W = 2, 16, 16            # H=16 -> two row blocks, exercising the halo path
    stride = 1

    def bn_params(k, c):
        k1, k2, k3, k4 = jax.random.split(k, 4)
        gamma = jax.random.uniform(k1, (c,), minval=0.5, maxval=1.5, dtype=jnp.float32)
        beta = 0.1 * jax.random.normal(k2, (c,), dtype=jnp.float32)
        mean = 0.1 * jax.random.normal(k3, (c,), dtype=jnp.float32)
        var = jax.random.uniform(k4, (c,), minval=0.5, maxval=1.5, dtype=jnp.float32)
        return gamma, beta, mean, var

    params = {
        "bn1": bn_params(keys[0], inplanes),
        "bn2": bn_params(keys[1], planes),
        "bn3": bn_params(keys[2], planes),
        "w1": 0.1 * jax.random.normal(keys[3], (planes, inplanes, 1, 1), dtype=jnp.float32),
        "w2": 0.1 * jax.random.normal(keys[4], (planes, planes, 3, 3), dtype=jnp.float32),
        "w3": 0.1 * jax.random.normal(keys[5], (planes * 4, planes, 1, 1), dtype=jnp.float32),
    }
    x = jax.random.normal(keys[6], (N, inplanes, H, W), dtype=jnp.float32)

    out = bottleneck_forward(x, params, stride=stride)
    out = jax.block_until_ready(out)

    ref = _bottleneck_ref(x, params, stride=stride)
    assert out.shape == ref.shape, (out.shape, ref.shape)
    max_diff = float(jnp.max(jnp.abs(out - ref)))
    assert jnp.allclose(out, ref, atol=5e-2, rtol=5e-2), \
        f"mismatch vs reference, max|diff|={max_diff}"

    print("KERNEL_OK")
</pallas_src>

<mosaic_0001>
module attributes {stable_mosaic.version = 11 : i64} {
  func.func @_bn_relu_conv1x1_bn_relu_kernel(%arg0: i32, %arg1: memref<1x64x256xf32, #tpu.memory_space<vmem>>, %arg2: memref<64x16xbf16, #tpu.memory_space<vmem>>, %arg3: memref<1x64xf32, #tpu.memory_space<vmem>>, %arg4: memref<1x64xf32, #tpu.memory_space<vmem>>, %arg5: memref<1x16xf32, #tpu.memory_space<vmem>>, %arg6: memref<1x16xf32, #tpu.memory_space<vmem>>, %arg7: memref<1x256x16xbf16, #tpu.memory_space<vmem>>) attributes {dimension_semantics = [#tpu.dimension_semantics<parallel>], iteration_bounds = array<i64: 2>, scalar_prefetch = 0 : i64, scratch_operands = 0 : i64, tpu.core_type = #tpu.core_type<tc>, window_params = [{transform_indices = @transform_0, window_bounds = array<i64: 1, 64, 256>}, {pipeline_mode = #tpu.pipeline_mode<synchronous>, transform_indices = @transform_1, window_bounds = array<i64: 64, 16>}, {pipeline_mode = #tpu.pipeline_mode<synchronous>, transform_indices = @transform_2, window_bounds = array<i64: 1, 64>}, {pipeline_mode = #tpu.pipeline_mode<synchronous>, transform_indices = @transform_3, window_bounds = array<i64: 1, 64>}, {pipeline_mode = #tpu.pipeline_mode<synchronous>, transform_indices = @transform_4, window_bounds = array<i64: 1, 16>}, {pipeline_mode = #tpu.pipeline_mode<synchronous>, transform_indices = @transform_5, window_bounds = array<i64: 1, 16>}, {transform_indices = @transform_6, window_bounds = array<i64: 1, 256, 16>}]} {
    %c0 = arith.constant 0 : index
    %c0_0 = arith.constant 0 : index
    %c0_1 = arith.constant 0 : index
    %0 = vector.load %arg1[%c0, %c0_0, %c0_1] : memref<1x64x256xf32, #tpu.memory_space<vmem>>, vector<1x64x256xf32>
    %1 = vector.shape_cast %0 : vector<1x64x256xf32> to vector<64x256xf32>
    %2 = tpu.transpose %1, [1, 0] : vector<64x256xf32> -> vector<256x64xf32>
    %c0_2 = arith.constant 0 : index
    %c0_3 = arith.constant 0 : index
    %3 = vector.load %arg3[%c0_2, %c0_3] : memref<1x64xf32, #tpu.memory_space<vmem>>, vector<1x64xf32>
    %4 = vector.broadcast %3 : vector<1x64xf32> to vector<256x64xf32>
    %5 = arith.mulf %2, %4 : vector<256x64xf32>
    %c0_4 = arith.constant 0 : index
    %c0_5 = arith.constant 0 : index
    %6 = vector.load %arg4[%c0_4, %c0_5] : memref<1x64xf32, #tpu.memory_space<vmem>>, vector<1x64xf32>
    %7 = vector.broadcast %6 : vector<1x64xf32> to vector<256x64xf32>
    %8 = arith.addf %5, %7 : vector<256x64xf32>
    %cst = arith.constant 0.000000e+00 : f32
    %9 = vector.broadcast %cst : f32 to vector<256x64xf32>
    %10 = arith.maximumf %8, %9 : vector<256x64xf32>
    %11 = arith.truncf %10 : vector<256x64xf32> to vector<256x64xbf16>
    %c0_6 = arith.constant 0 : index
    %c0_7 = arith.constant 0 : index
    %12 = vector.load %arg2[%c0_6, %c0_7] : memref<64x16xbf16, #tpu.memory_space<vmem>>, vector<64x16xbf16>
    %cst_8 = arith.constant dense<0.000000e+00> : vector<256x16xf32>
    %13 = tpu.matmul %11, %12, %cst_8 {dimension_numbers = #tpu.dot_dimension_numbers<[1], [0], [0], [1], [0, 0, 1, 1], [], []>} : vector<256x64xbf16>, vector<64x16xbf16>, vector<256x16xf32> -> vector<256x16xf32>
    %c0_9 = arith.constant 0 : index
    %c0_10 = arith.constant 0 : index
    %14 = vector.load %arg5[%c0_9, %c0_10] : memref<1x16xf32, #tpu.memory_space<vmem>>, vector<1x16xf32>
    %15 = vector.broadcast %14 : vector<1x16xf32> to vector<256x16xf32>
    %16 = arith.mulf %13, %15 : vector<256x16xf32>
    %c0_11 = arith.constant 0 : index
    %c0_12 = arith.constant 0 : index
    %17 = vector.load %arg6[%c0_11, %c0_12] : memref<1x16xf32, #tpu.memory_space<vmem>>, vector<1x16xf32>
    %18 = vector.broadcast %17 : vector<1x16xf32> to vector<256x16xf32>
    %19 = arith.addf %16, %18 : vector<256x16xf32>
    %cst_13 = arith.constant 0.000000e+00 : f32
    %20 = vector.broadcast %cst_13 : f32 to vector<256x16xf32>
    %21 = arith.maximumf %19, %20 : vector<256x16xf32>
    %22 = arith.truncf %21 : vector<256x16xf32> to vector<256x16xbf16>
    %c0_14 = arith.constant 0 : index
    %c0_15 = arith.constant 0 : index
    %c0_16 = arith.constant 0 : index
    %23 = vector.load %arg7[%c0_14, %c0_15, %c0_16] : memref<1x256x16xbf16, #tpu.memory_space<vmem>>, vector<1x256x16xbf16>
    %24 = vector.shape_cast %23 : vector<1x256x16xbf16> to vector<256x16xbf16>
    %25 = vector.shape_cast %22 : vector<256x16xbf16> to vector<1x256x16xbf16>
    tpu.vector_store %arg7[%c0_14, %c0_15, %c0_16], %25 {strides = array<i32>} : memref<1x256x16xbf16, #tpu.memory_space<vmem>>, vector<1x256x16xbf16>,
    return
  }
  func.func @transform_0(%arg0: i32) -> (i32, i32, i32) {
    %c0_i32 = arith.constant 0 : i32
    %c0_i32_0 = arith.constant 0 : i32
    %c0_i32_1 = arith.constant 0 : i32
    return %arg0, %c0_i32, %c0_i32_0 : i32, i32, i32
  }
  func.func @transform_1(%arg0: i32) -> (i32, i32) {
    %c0_i32 = arith.constant 0 : i32
    %c0_i32_0 = arith.constant 0 : i32
    %c0_i32_1 = arith.constant 0 : i32
    return %c0_i32, %c0_i32_0 : i32, i32
  }
  func.func @transform_2(%arg0: i32) -> (i32, i32) {
    %c0_i32 = arith.constant 0 : i32
    %c0_i32_0 = arith.constant 0 : i32
    %c0_i32_1 = arith.constant 0 : i32
    return %c0_i32, %c0_i32_0 : i32, i32
  }
  func.func @transform_3(%arg0: i32) -> (i32, i32) {
    %c0_i32 = arith.constant 0 : i32
    %c0_i32_0 = arith.constant 0 : i32
    %c0_i32_1 = arith.constant 0 : i32
    return %c0_i32, %c0_i32_0 : i32, i32
  }
  func.func @transform_4(%arg0: i32) -> (i32, i32) {
    %c0_i32 = arith.constant 0 : i32
    %c0_i32_0 = arith.constant 0 : i32
    %c0_i32_1 = arith.constant 0 : i32
    return %c0_i32, %c0_i32_0 : i32, i32
  }
  func.func @transform_5(%arg0: i32) -> (i32, i32) {
    %c0_i32 = arith.constant 0 : i32
    %c0_i32_0 = arith.constant 0 : i32
    %c0_i32_1 = arith.constant 0 : i32
    return %c0_i32, %c0_i32_0 : i32, i32
  }
  func.func @transform_6(%arg0: i32) -> (i32, i32, i32) {
    %c0_i32 = arith.constant 0 : i32
    %c0_i32_0 = arith.constant 0 : i32
    %c0_i32_1 = arith.constant 0 : i32
    return %arg0, %c0_i32, %c0_i32_0 : i32, i32, i32
  }
}

</mosaic_0001>

<llo_original>
// kernel: tpu_custom_call.1
$region0: #{tpu_custom_call.1}
  #allocation0 [shape = 'u32[]', space=smem, size = 0x4, offset = 0x4, fixed_abs, tag = 'smem constant byte address 0x4 - core index']
  #allocation1 [shape = 'u32[144,128]{1,0:T(1,128)}', space=vmem, size = 0x12000, scoped, tag = 'internal scratch']
  %s0 = inlined_call_operand.hbm [shape: f32[2,64,256], index: 0, kind: input, shape index: {}]
  %s1 = inlined_call_operand.vmem [shape: bf16[64,16], index: 1, kind: input, shape index: {}]
  %s2 = inlined_call_operand.vmem [shape: f32[1,64], index: 2, kind: input, shape index: {}]
  %s3 = inlined_call_operand.vmem [shape: f32[1,64], index: 3, kind: input, shape index: {}]
  %s4 = inlined_call_operand.vmem [shape: f32[1,16], index: 4, kind: input, shape index: {}]
  %s5 = inlined_call_operand.vmem [shape: f32[1,16], index: 5, kind: input, shape index: {}]
  %s6 = inlined_call_operand.vmem [shape: bf16[2,256,16], index: 6, kind: output, shape index: {}]
  %s7 = sld [smem:[#allocation0]]
  $region61: #{tpu_custom_call.1} parent=0
    _
  %s9 = ssub.s32 1, %s7
  %s10 = scalar_select 0, %s9, %s7
  $region1: #{tpu_custom_call.1} parent=0
    #allocation2 [shape = 'u8[131072]{0}', space=vmem, size = 0x20000, scoped, tag = 'input window, operand 0']
    #allocation3 [shape = 's32[2]{0}', space=sflag, size = 0x8, scoped, tag = 'scoped memory for tpu_custom_call.1']
    %11 = vsyncpa [#allocation3], 0
    %s12 = scalar_lea.sflag [#allocation3], 1
    %13 = vsyncpa %s12, 0
    loop: start=0, step=1, limit=4
    $region2: #{tpu_custom_call.1} parent=1 // loop_pre_header
      _
    $region3: #{tpu_custom_call.1} parent=1 // loop_header
      %s15 = sphi 0, %s19
      %p16 = scmp.ge.s32.totalorder %s15, 4
      %s25 = sphi 0, %s27
      %s28 = sphi 0, %s25
      %s29 = sphi 0, %s28
      %s45 = sphi 0, %s29
      %s49 = sphi 0, %s49
      %s51 = sphi 0, %s49
      %s52 = sphi 0, %s51
      %s66 = sphi 0, %s52
      %s70 = sphi 0, %s70
      %s72 = sphi 0, %s70
      %s73 = sphi 0, %s72
      %s87 = sphi 0, %s73
      %s91 = sphi 0, %s91
      %s93 = sphi 0, %s91
      %s94 = sphi 0, %s93
      %s108 = sphi 0, %s94
      %s112 = sphi 0, %s112
      %s114 = sphi 0, %s112
      %s115 = sphi 0, %s114
      %s129 = sphi 0, %s115
      %s133 = sphi 0, %s133
      %s135 = sphi 0, %s133
      %s136 = sphi 0, %s135
      %s150 = sphi 0, %s136
      %s156 = sphi 0, %s158
      %s159 = sphi 0, %s156
      %s160 = sphi 0, %s159
      %s176 = sphi 0, %s160
    $region4: #{tpu_custom_call.1} parent=1 // loop_header_branch
      %18 = sbr.rel (%p16) target = $region8
    $region5: #{tpu_custom_call.1} parent=1 // loop_body
      %s20 = ssub.s32 %s15, 1
      %s21 = ssub.s32 %s15, 2
      %s22 = sadd.s32 %s15, 1
      %s23 = ssub.s32 %s15, %s22
      %p24 = scmp.eq.s32.totalorder %s23, 0
      %s26 = sadd.s32 %s25, 1
      %s27 = scalar_select %p24, %s25, %s26
      %p30 = pneg %p24
      %p31 = scmp.eq.s32.totalorder %s15, 1
      %p32 = por %p30, %p31
      %p33 = scmp.ne.s32.totalorder %s25, %s28
      %p34 = scmp.eq.s32.totalorder %s15, 0
      %p35 = por %p33, %p34
      %p36 = scmp.ne.s32.totalorder %s25, %s28
      %p37 = scmp.eq.s32.totalorder %s20, 1
      %p38 = por %p36, %p37
      %p39 = scmp.ne.s32.totalorder %s28, %s29
      %p40 = scmp.eq.s32.totalorder %s20, 0
      %p41 = por %p39, %p40
      %p42 = scmp.ne.s32.totalorder %s28, %s29
      %p43 = scmp.eq.s32.totalorder %s21, 1
      %p44 = por %p42, %p43
      %p46 = scmp.ne.s32.totalorder %s29, %s45
      %p47 = scmp.eq.s32.totalorder %s21, 0
      %p48 = por %p46, %p47
      %s50 = sadd.s32 %s49, 1
      %p53 = scmp.eq.s32.totalorder %s15, 1
      %p54 = scmp.ne.s32.totalorder %s49, %s51
      %p55 = scmp.eq.s32.totalorder %s15, 0
      %p56 = por %p54, %p55
      %p57 = scmp.ne.s32.totalorder %s49, %s51
      %p58 = scmp.eq.s32.totalorder %s20, 1
      %p59 = por %p57, %p58
      %p60 = scmp.ne.s32.totalorder %s51, %s52
      %p61 = scmp.eq.s32.totalorder %s20, 0
      %p62 = por %p60, %p61
      %p63 = scmp.ne.s32.totalorder %s51, %s52
      %p64 = scmp.eq.s32.totalorder %s21, 1
      %p65 = por %p63, %p64
      %p67 = scmp.ne.s32.totalorder %s52, %s66
      %p68 = scmp.eq.s32.totalorder %s21, 0
      %p69 = por %p67, %p68
      %s71 = sadd.s32 %s70, 1
      %p74 = scmp.eq.s32.totalorder %s15, 1
      %p75 = scmp.ne.s32.totalorder %s70, %s72
      %p76 = scmp.eq.s32.totalorder %s15, 0
      %p77 = por %p75, %p76
      %p78 = scmp.ne.s32.totalorder %s70, %s72
      %p79 = scmp.eq.s32.totalorder %s20, 1
      %p80 = por %p78, %p79
      %p81 = scmp.ne.s32.totalorder %s72, %s73
      %p82 = scmp.eq.s32.totalorder %s20, 0
      %p83 = por %p81, %p82
      %p84 = scmp.ne.s32.totalorder %s72, %s73
      %p85 = scmp.eq.s32.totalorder %s21, 1
      %p86 = por %p84, %p85
      %p88 = scmp.ne.s32.totalorder %s73, %s87
      %p89 = scmp.eq.s32.totalorder %s21, 0
      %p90 = por %p88, %p89
      %s92 = sadd.s32 %s91, 1
      %p95 = scmp.eq.s32.totalorder %s15, 1
      %p96 = scmp.ne.s32.totalorder %s91, %s93
      %p97 = scmp.eq.s32.totalorder %s15, 0
      %p98 = por %p96, %p97
      %p99 = scmp.ne.s32.totalorder %s91, %s93
      %p100 = scmp.eq.s32.totalorder %s20, 1
      %p101 = por %p99, %p100
      %p102 = scmp.ne.s32.totalorder %s93, %s94
      %p103 = scmp.eq.s32.totalorder %s20, 0
      %p104 = por %p102, %p103
      %p105 = scmp.ne.s32.totalorder %s93, %s94
      %p106 = scmp.eq.s32.totalorder %s21, 1
      %p107 = por %p105, %p106
      %p109 = scmp.ne.s32.totalorder %s94, %s108
      %p110 = scmp.eq.s32.totalorder %s21, 0
      %p111 = por %p109, %p110
      %s113 = sadd.s32 %s112, 1
      %p116 = scmp.eq.s32.totalorder %s15, 1
      %p117 = scmp.ne.s32.totalorder %s112, %s114
      %p118 = scmp.eq.s32.totalorder %s15, 0
      %p119 = por %p117, %p118
      %p120 = scmp.ne.s32.totalorder %s112, %s114
      %p121 = scmp.eq.s32.totalorder %s20, 1
      %p122 = por %p120, %p121
      %p123 = scmp.ne.s32.totalorder %s114, %s115
      %p124 = scmp.eq.s32.totalorder %s20, 0
      %p125 = por %p123, %p124
      %p126 = scmp.ne.s32.totalorder %s114, %s115
      %p127 = scmp.eq.s32.totalorder %s21, 1
      %p128 = por %p126, %p127
      %p130 = scmp.ne.s32.totalorder %s115, %s129
      %p131 = scmp.eq.s32.totalorder %s21, 0
      %p132 = por %p130, %p131
      %s134 = sadd.s32 %s133, 1
      %p137 = scmp.eq.s32.totalorder %s15, 1
      %p138 = scmp.ne.s32.totalorder %s133, %s135
      %p139 = scmp.eq.s32.totalorder %s15, 0
      %p140 = por %p138, %p139
      %p141 = scmp.ne.s32.totalorder %s133, %s135
      %p142 = scmp.eq.s32.totalorder %s20, 1
      %p143 = por %p141, %p142
      %p144 = scmp.ne.s32.totalorder %s135, %s136
      %p145 = scmp.eq.s32.totalorder %s20, 0
      %p146 = por %p144, %p145
      %p147 = scmp.ne.s32.totalorder %s135, %s136
      %p148 = scmp.eq.s32.totalorder %s21, 1
      %p149 = por %p147, %p148
      %p151 = scmp.ne.s32.totalorder %s136, %s150
      %p152 = scmp.eq.s32.totalorder %s21, 0
      %p153 = por %p151, %p152
      %s154 = ssub.s32 %s15, %s22
      %p155 = scmp.eq.s32.totalorder %s154, 0
      %s157 = sadd.s32 %s156, 1
      %s158 = scalar_select %p155, %s156, %s157
      %p161 = pneg %p155
      %p162 = scmp.eq.s32.totalorder %s15, 1
      %p163 = por %p161, %p162
      %p164 = scmp.ne.s32.totalorder %s156, %s159
      %p165 = scmp.eq.s32.totalorder %s15, 0
      %p166 = por %p164, %p165
      %p167 = scmp.ne.s32.totalorder %s156, %s159
      %p168 = scmp.eq.s32.totalorder %s20, 1
      %p169 = por %p167, %p168
      %p170 = scmp.ne.s32.totalorder %s159, %s160
      %p171 = scmp.eq.s32.totalorder %s20, 0
      %p172 = por %p170, %p171
      %p173 = scmp.ne.s32.totalorder %s159, %s160
      %p174 = scmp.eq.s32.totalorder %s21, 1
      %p175 = por %p173, %p174
      %p177 = scmp.ne.s32.totalorder %s160, %s176
      %p178 = scmp.eq.s32.totalorder %s21, 0
      %p179 = por %p177, %p178
      %p180 = scmp.le.s32.totalorder 1, %s15
      %p181 = scmp.lt.s32.totalorder %s15, 3
      %p182 = pnand %p180, %p181
      %p183 = pneg %p182
      // Predicated region
      $region9: #{tpu_custom_call.1} parent=5 // pred_check
        _
      $region10: #{tpu_custom_call.1} parent=5 // pred_check_branch
        %185 = sbr.rel (%p182) target = $region12
      $region11: #{tpu_custom_call.1} parent=5 // pred_region
        %s186 = ssub.s32 %s15, 1
        // Predicated region
        $region13: #{tpu_custom_call.1} parent=11 // pred_check
          %p187 = pneg %p62
        $region14: #{tpu_custom_call.1} parent=11 // pred_check_branch
          %189 = sbr.rel (%p187) target = $region16
        $region15: #{tpu_custom_call.1} parent=11 // pred_region
          _
        $region16: #{tpu_custom_call.1} parent=11 // pred_fallthru
          _
        // Predicated region
        $region17: #{tpu_custom_call.1} parent=11 // pred_check
          %p190 = pneg %p83
        $region18: #{tpu_custom_call.1} parent=11 // pred_check_branch
          %192 = sbr.rel (%p190) target = $region20
        $region19: #{tpu_custom_call.1} parent=11 // pred_region
          _
        $region20: #{tpu_custom_call.1} parent=11 // pred_fallthru
          _
        // Predicated region
        $region21: #{tpu_custom_call.1} parent=11 // pred_check
          %p193 = pneg %p104
        $region22: #{tpu_custom_call.1} parent=11 // pred_check_branch
          %195 = sbr.rel (%p193) target = $region24
        $region23: #{tpu_custom_call.1} parent=11 // pred_region
          _
        $region24: #{tpu_custom_call.1} parent=11 // pred_fallthru
          _
        // Predicated region
        $region25: #{tpu_custom_call.1} parent=11 // pred_check
          %p196 = pneg %p125
        $region26: #{tpu_custom_call.1} parent=11 // pred_check_branch
          %198 = sbr.rel (%p196) target = $region28
        $region27: #{tpu_custom_call.1} parent=11 // pred_region
          _
        $region28: #{tpu_custom_call.1} parent=11 // pred_fallthru
          _
        // Predicated region
        $region29: #{tpu_custom_call.1} parent=11 // pred_check
          %p199 = pneg %p146
        $region30: #{tpu_custom_call.1} parent=11 // pred_check_branch
          %201 = sbr.rel (%p199) target = $region32
        $region31: #{tpu_custom_call.1} parent=11 // pred_region
          _
        $region32: #{tpu_custom_call.1} parent=11 // pred_fallthru
          _
      $region12: #{tpu_custom_call.1} parent=5 // pred_fallthru
        _
      %p202 = scmp.lt.s32.totalorder %s15, 2
      // Predicated region
      $region33: #{tpu_custom_call.1} parent=5 // pred_check
        %p203 = pneg %p202
      $region34: #{tpu_custom_call.1} parent=5 // pred_check_branch
        %205 = sbr.rel (%p203) target = $region36
      $region35: #{tpu_custom_call.1} parent=5 // pred_region
        // Predicated region
        $region37: #{tpu_custom_call.1} parent=35 // pred_check
          %p206 = pneg %p35
        $region38: #{tpu_custom_call.1} parent=35 // pred_check_branch
          %208 = sbr.rel (%p206) target = $region40
        $region39: #{tpu_custom_call.1} parent=35 // pred_region
          %s209 = sand.u32 %s25, 1
          %s210 = scalar_lea.sflag [#allocation3], %s209
          %s211 = sand.u32 %s25, 1
          %s212 = smul.addr %s211, 128
          %s213 = scalar_lea.vmem [#allocation2], %s212
          %s215 = ssub.s32 2048, 2048
          %216 = vsyncadd %s210, %s215
          %s217 = smul.addr %s15, 16
          %s218 = smul.addr %s217, 128
          %s219 = scalar_lea.hbm %s0, %s218
          %s220 = sshll.u32 %s213, 4
          %s221 = int_to_ptr.vmem [resolvable:$true] %s220
          %226 = dma.hbm_to_vmem [thread:$0]  %s219, 2048, %s221, %s210, 256, 256, 16
        $region40: #{tpu_custom_call.1} parent=35 // pred_fallthru
          _
      $region36: #{tpu_custom_call.1} parent=5 // pred_fallthru
        _
      %p227 = scmp.le.s32.totalorder 1, %s15
      %p228 = scmp.lt.s32.totalorder %s15, 3
      %p229 = pnand %p227, %p228
      %p230 = pneg %p229
      // Predicated region
      $region41: #{tpu_custom_call.1} parent=5 // pred_check
        _
      $region42: #{tpu_custom_call.1} parent=5 // pred_check_branch
        %232 = sbr.rel (%p229) target = $region44
      $region43: #{tpu_custom_call.1} parent=5 // pred_region
        %s233 = ssub.s32 %s15, 1
        %s234 = sand.u32 %s28, 1
        %s235 = scalar_lea.sflag [#allocation3], %s234
        %s236 = sand.u32 %s28, 1
        %s237 = smul.addr %s236, 128
        %s238 = scalar_lea.vmem [#allocation2], %s237
        // Predicated region
        $region45: #{tpu_custom_call.1} parent=43 // pred_check
          %p239 = pneg %p41
        $region46: #{tpu_custom_call.1} parent=43 // pred_check_branch
          %241 = sbr.rel (%p239) target = $region48
        $region47: #{tpu_custom_call.1} parent=43 // pred_region
          %242 = dma.done %s235, 2048
        $region48: #{tpu_custom_call.1} parent=43 // pred_fallthru
          _
        %s243 = sand.u32 %s28, 1
        %s244 = scalar_lea.sflag [#allocation3], %s243
        %s245 = sand.u32 %s28, 1
        %s246 = smul.addr %s245, 128
        %s247 = scalar_lea.vmem [#allocation2], %s246
        %p248 = pneg %p41
        %p249 = pneg %p38
        %p250 = pneg %p62
        %p251 = pneg %p59
        %p252 = pneg %p83
        %p253 = pneg %p80
        %p254 = pneg %p104
        %p255 = pneg %p101
        %p256 = pneg %p125
        %p257 = pneg %p122
        %p258 = pneg %p146
        %p259 = pneg %p143
        %p260 = pneg %p172
        %p261 = pneg %p169
        %p262 = scmp.lt.s32.totalorder %s20, 1
        %s263 = scalar_select %p262, %s20, 1
        %s264 = smul.addr %s263, 32
        %s265 = smul.addr %s264, 4
        %s266 = scalar_lea.vmem %s6, %s265
        %p267 = scmp.lt.s32.totalorder %s20, 1
        %s268 = scalar_select %p267, %s20, 1
        %s269 = smul.addr %s268, 32
        %s270 = smul.addr %s269, 4
        %s271 = scalar_lea.vmem %s6, %s270
        %v273 = vld [vmem:[%s238] sm:$0xff]
        %v274 = vld [vmem:[%s238 + $0x8] sm:$0xff]
        %v275 = vld [vmem:[%s238 + $0x10] sm:$0xff]
        %v276 = vld [vmem:[%s238 + $0x18] sm:$0xff]
        %v277 = vld [vmem:[%s238 + $0x20] sm:$0xff]
        %v278 = vld [vmem:[%s238 + $0x28] sm:$0xff]
        %v279 = vld [vmem:[%s238 + $0x30] sm:$0xff]
        %v280 = vld [vmem:[%s238 + $0x38] sm:$0xff]
        %v281 = vld [vmem:[%s238 + $0x40] sm:$0xff]
        %v282 = vld [vmem:[%s238 + $0x48] sm:$0xff]
        %v283 = vld [vmem:[%s238 + $0x50] sm:$0xff]
        %v284 = vld [vmem:[%s238 + $0x58] sm:$0xff]
        %v285 = vld [vmem:[%s238 + $0x60] sm:$0xff]
        %v286 = vld [vmem:[%s238 + $0x68] sm:$0xff]
        %v287 = vld [vmem:[%s238 + $0x70] sm:$0xff]
        %v288 = vld [vmem:[%s238 + $0x78] sm:$0xff]
        %289 = vxpose.xlu0.b32.start [1/16] %v273, 128
        %290 = vxpose.xlu0.b32.cont [2/16] %v275, 128
        %291 = vxpose.xlu0.b32.cont [3/16] %v277, 128
        %292 = vxpose.xlu0.b32.cont [4/16] %v279, 128
        %293 = vxpose.xlu0.b32.cont [5/16] %v281, 128
        %294 = vxpose.xlu0.b32.cont [6/16] %v283, 128
        %295 = vxpose.xlu0.b32.cont [7/16] %v285, 128
        %296 = vxpose.xlu0.b32.cont [8/16] %v287, 128
        %297 = vxpose.xlu0.b32.cont [9/16] 0.0, 128
        %298 = vxpose.xlu0.b32.cont [10/16] 0.0, 128
        %299 = vxpose.xlu0.b32.cont [11/16] 0.0, 128
        %300 = vxpose.xlu0.b32.cont [12/16] 0.0, 128
        %301 = vxpose.xlu0.b32.cont [13/16] 0.0, 128
        %302 = vxpose.xlu0.b32.cont [14/16] 0.0, 128
        %303 = vxpose.xlu0.b32.cont [15/16] 0.0, 128
        %304 = vxpose.xlu0.b32.end [16/16] 0.0, 128
        %v305 = vpop.trf.xlu0
        %v306 = vpop.trf.xlu0
        %v307 = vpop.trf.xlu0
        %v308 = vpop.trf.xlu0
        %v309 = vpop.trf.xlu0
        %v310 = vpop.trf.xlu0
        %v311 = vpop.trf.xlu0
        %v312 = vpop.trf.xlu0
        %v313 = vpop.trf.xlu0
        %v314 = vpop.trf.xlu0
        %v315 = vpop.trf.xlu0
        %v316 = vpop.trf.xlu0
        %v317 = vpop.trf.xlu0
        %v318 = vpop.trf.xlu0
        %v319 = vpop.trf.xlu0
        %v320 = vpop.trf.xlu0
        %321 = vxpose.xlu0.b32.start [1/16] %v274, 128
        %322 = vxpose.xlu0.b32.cont [2/16] %v276, 128
        %323 = vxpose.xlu0.b32.cont [3/16] %v278, 128
        %324 = vxpose.xlu0.b32.cont [4/16] %v280, 128
        %325 = vxpose.xlu0.b32.cont [5/16] %v282, 128
        %326 = vxpose.xlu0.b32.cont [6/16] %v284, 128
        %327 = vxpose.xlu0.b32.cont [7/16] %v286, 128
        %328 = vxpose.xlu0.b32.cont [8/16] %v288, 128
        %329 = vxpose.xlu0.b32.cont [9/16] 0.0, 128
        %330 = vxpose.xlu0.b32.cont [10/16] 0.0, 128
        %331 = vxpose.xlu0.b32.cont [11/16] 0.0, 128
        %332 = vxpose.xlu0.b32.cont [12/16] 0.0, 128
        %333 = vxpose.xlu0.b32.cont [13/16] 0.0, 128
        %334 = vxpose.xlu0.b32.cont [14/16] 0.0, 128
        %335 = vxpose.xlu0.b32.cont [15/16] 0.0, 128
        %336 = vxpose.xlu0.b32.end [16/16] 0.0, 128
        %v337 = vpop.trf.xlu0
        %v338 = vpop.trf.xlu0
        %v339 = vpop.trf.xlu0
        %v340 = vpop.trf.xlu0
        %v341 = vpop.trf.xlu0
        %v342 = vpop.trf.xlu0
        %v343 = vpop.trf.xlu0
        %v344 = vpop.trf.xlu0
        %v345 = vpop.trf.xlu0
        %v346 = vpop.trf.xlu0
        %v347 = vpop.trf.xlu0
        %v348 = vpop.trf.xlu0
        %v349 = vpop.trf.xlu0
        %v350 = vpop.trf.xlu0
        %v351 = vpop.trf.xlu0
        %v352 = vpop.trf.xlu0
        %v353 = vld [vmem:[%s2] sm:$0x1]
        %v355 = vlaneseq
        %v356 = vshrl.u32 %v355, 7
        %v357 = vsub.s32 0, %v356
        %v358 = vrot.slane %v353, %v357
        %v360 = vmul.f32 %v305, %v358
        %v361 = vmul.f32 %v306, %v358
        %v362 = vmul.f32 %v307, %v358
        %v363 = vmul.f32 %v308, %v358
        %v364 = vmul.f32 %v309, %v358
        %v365 = vmul.f32 %v310, %v358
        %v366 = vmul.f32 %v311, %v358
        %v367 = vmul.f32 %v312, %v358
        %v368 = vmul.f32 %v313, %v358
        %v369 = vmul.f32 %v314, %v358
        %v370 = vmul.f32 %v315, %v358
        %v371 = vmul.f32 %v316, %v358
        %v372 = vmul.f32 %v317, %v358
        %v373 = vmul.f32 %v318, %v358
        %v374 = vmul.f32 %v319, %v358
        %v375 = vmul.f32 %v320, %v358
        %v376 = vmul.f32 %v337, %v358
        %v377 = vmul.f32 %v338, %v358
        %v378 = vmul.f32 %v339, %v358
        %v379 = vmul.f32 %v340, %v358
        %v380 = vmul.f32 %v341, %v358
        %v381 = vmul.f32 %v342, %v358
        %v382 = vmul.f32 %v343, %v358
        %v383 = vmul.f32 %v344, %v358
        %v384 = vmul.f32 %v345, %v358
        %v385 = vmul.f32 %v346, %v358
        %v386 = vmul.f32 %v347, %v358
        %v387 = vmul.f32 %v348, %v358
        %v388 = vmul.f32 %v349, %v358
        %v389 = vmul.f32 %v350, %v358
        %v390 = vmul.f32 %v351, %v358
        %v391 = vmul.f32 %v352, %v358
        %v392 = vld [vmem:[%s3] sm:$0x1]
        %v394 = vlaneseq
        %v395 = vshrl.u32 %v394, 7
        %v396 = vsub.s32 0, %v395
        %v397 = vrot.slane %v392, %v396
        %v399 = vadd.f32 %v360, %v397
        %v400 = vadd.f32 %v361, %v397
        %v401 = vadd.f32 %v362, %v397
        %v402 = vadd.f32 %v363, %v397
        %v403 = vadd.f32 %v364, %v397
        %v404 = vadd.f32 %v365, %v397
        %v405 = vadd.f32 %v366, %v397
        %v406 = vadd.f32 %v367, %v397
        %v407 = vadd.f32 %v368, %v397
        %v408 = vadd.f32 %v369, %v397
        %v409 = vadd.f32 %v370, %v397
        %v410 = vadd.f32 %v371, %v397
        %v411 = vadd.f32 %v372, %v397
        %v412 = vadd.f32 %v373, %v397
        %v413 = vadd.f32 %v374, %v397
        %v414 = vadd.f32 %v375, %v397
        %v415 = vadd.f32 %v376, %v397
        %v416 = vadd.f32 %v377, %v397
        %v417 = vadd.f32 %v378, %v397
        %v418 = vadd.f32 %v379, %v397
        %v419 = vadd.f32 %v380, %v397
        %v420 = vadd.f32 %v381, %v397
        %v421 = vadd.f32 %v382, %v397
        %v422 = vadd.f32 %v383, %v397
        %v423 = vadd.f32 %v384, %v397
        %v424 = vadd.f32 %v385, %v397
        %v425 = vadd.f32 %v386, %v397
        %v426 = vadd.f32 %v387, %v397
        %v427 = vadd.f32 %v388, %v397
        %v428 = vadd.f32 %v389, %v397
        %v429 = vadd.f32 %v390, %v397
        %v430 = vadd.f32 %v391, %v397
        %v431 = vmax.f32 %v399, 0.0
        %v432 = vmax.f32 %v400, 0.0
        %v433 = vmax.f32 %v401, 0.0
        %v434 = vmax.f32 %v402, 0.0
        %v435 = vmax.f32 %v403, 0.0
        %v436 = vmax.f32 %v404, 0.0
        %v437 = vmax.f32 %v405, 0.0
        %v438 = vmax.f32 %v406, 0.0
        %v439 = vmax.f32 %v407, 0.0
        %v440 = vmax.f32 %v408, 0.0
        %v441 = vmax.f32 %v409, 0.0
        %v442 = vmax.f32 %v410, 0.0
        %v443 = vmax.f32 %v411, 0.0
        %v444 = vmax.f32 %v412, 0.0
        %v445 = vmax.f32 %v413, 0.0
        %v446 = vmax.f32 %v414, 0.0
        %v447 = vmax.f32 %v415, 0.0
        %v448 = vmax.f32 %v416, 0.0
        %v449 = vmax.f32 %v417, 0.0
        %v450 = vmax.f32 %v418, 0.0
        %v451 = vmax.f32 %v419, 0.0
        %v452 = vmax.f32 %v420, 0.0
        %v453 = vmax.f32 %v421, 0.0
        %v454 = vmax.f32 %v422, 0.0
        %v455 = vmax.f32 %v423, 0.0
        %v456 = vmax.f32 %v424, 0.0
        %v457 = vmax.f32 %v425, 0.0
        %v458 = vmax.f32 %v426, 0.0
        %v459 = vmax.f32 %v427, 0.0
        %v460 = vmax.f32 %v428, 0.0
        %v461 = vmax.f32 %v429, 0.0
        %v462 = vmax.f32 %v430, 0.0
        %v463 = vpack.c.bf16 %v432, %v431
        %v464 = vpack.c.bf16 %v434, %v433
        %v465 = vpack.c.bf16 %v436, %v435
        %v466 = vpack.c.bf16 %v438, %v437
        %v467 = vpack.c.bf16 %v440, %v439
        %v468 = vpack.c.bf16 %v442, %v441
        %v469 = vpack.c.bf16 %v444, %v443
        %v470 = vpack.c.bf16 %v446, %v445
        %v471 = vpack.c.bf16 %v448, %v447
        %v472 = vpack.c.bf16 %v450, %v449
        %v473 = vpack.c.bf16 %v452, %v451
        %v474 = vpack.c.bf16 %v454, %v453
        %v475 = vpack.c.bf16 %v456, %v455
        %v476 = vpack.c.bf16 %v458, %v457
        %v477 = vpack.c.bf16 %v460, %v459
        %v478 = vpack.c.bf16 %v462, %v461
        %v479 = vld [vmem:[%s1] sm:$0xf]
        %v480 = vld [vmem:[%s1 + $0x4] sm:$0xf]
        %v481 = vld [vmem:[%s1 + $0x8] sm:$0xf]
        %v482 = vld [vmem:[%s1 + $0xc] sm:$0xf]
        %v483 = vld [vmem:[%s1 + $0x10] sm:$0xf]
        %v484 = vld [vmem:[%s1 + $0x14] sm:$0xf]
        %v485 = vld [vmem:[%s1 + $0x18] sm:$0xf]
        %v486 = vld [vmem:[%s1 + $0x1c] sm:$0xf]
        %v495 = vunpack.c.l.b16 %v479
        %v496 = vunpack.c.l.b16 %v480
        %v497 = vunpack.c.l.b16 %v481
        %v498 = vunpack.c.l.b16 %v482
        %v499 = vunpack.c.l.b16 %v483
        %v500 = vunpack.c.l.b16 %v484
        %v501 = vunpack.c.l.b16 %v485
        %v502 = vunpack.c.l.b16 %v486
        %v503 = vpack.c.b16 %v496, %v495
        %v504 = vpack.c.b16 %v498, %v497
        %v505 = vpack.c.b16 %v500, %v499
        %v506 = vpack.c.b16 %v502, %v501
        %vm511 = vcmask 523264
        %v513 = vsel %vm511, %v463, 0
        %v516 = vsel %vm511, %v464, 0
        %v519 = vsel %vm511, %v465, 0
        %v522 = vsel %vm511, %v466, 0
        %v525 = vsel %vm511, %v467, 0
        %v528 = vsel %vm511, %v468, 0
        %v531 = vsel %vm511, %v469, 0
        %v534 = vsel %vm511, %v470, 0
        %v537 = vsel %vm511, %v471, 0
        %v540 = vsel %vm511, %v472, 0
        %v543 = vsel %vm511, %v473, 0
        %v546 = vsel %vm511, %v474, 0
        %v549 = vsel %vm511, %v475, 0
        %v552 = vsel %vm511, %v476, 0
        %v555 = vsel %vm511, %v477, 0
        %v558 = vsel %vm511, %v478, 0
        %560 = vmatprep.subr.bf16.mxu0 0
        %561 = vmatpush1.bf16.msra.mxu0 %v503
        %562 = vmatprep.subr.bf16.mxu0 0
        %563 = vmatpush1.bf16.msra.mxu0 %v504
        %564 = vmatprep.subr.bf16.mxu0 0
        %565 = vmatpush1.bf16.msra.mxu0 %v505
        %566 = vmatprep.subr.bf16.mxu0 0
        %567 = vmatpush1.bf16.msra.mxu0 %v506
        %568 = vmatprep.subr.bf16.mxu0 0
        %569 = vmatpush1.bf16.msra.mxu0 0
        %570 = vmatprep.subr.bf16.mxu0 0
        %571 = vmatpush1.bf16.msra.mxu0 0
        %572 = vmatprep.subr.bf16.mxu0 0
        %573 = vmatpush1.bf16.msra.mxu0 0
        %574 = vmatprep.subr.bf16.mxu0 0
        %575 = vmatpush1.bf16.msra.mxu0 0
        %576 = vmatprep.subr.bf16.mxu0 0
        %577 = vmatpush1.bf16.msra.mxu0 0
        %578 = vmatprep.subr.bf16.mxu0 0
        %579 = vmatpush1.bf16.msra.mxu0 0
        %580 = vmatprep.subr.bf16.mxu0 0
        %581 = vmatpush1.bf16.msra.mxu0 0
        %582 = vmatprep.subr.bf16.mxu0 0
        %583 = vmatpush1.bf16.msra.mxu0 0
        %584 = vmatprep.subr.bf16.mxu0 0
        %585 = vmatpush1.bf16.msra.mxu0 0
        %586 = vmatprep.subr.bf16.mxu0 0
        %587 = vmatpush1.bf16.msra.mxu0 0
        %588 = vmatprep.subr.bf16.mxu0 0
        %589 = vmatpush1.bf16.msra.mxu0 0
        %590 = vmatprep.subr.bf16.mxu0 0
        %591 = vmatpush1.bf16.msra.mxu0 0
        %592 = vmatprep.mubr.bf16.mxu0 0
        %593 = vmatmul.mubr.bf16.gmra.mrb[0].mxu0 %v513
        %v594 = vpop.f32.mrb[0].mxu0
        %v595 = vadd.f32 0.0, %v594
        %v596 = vpop.f32.mrb[0].mxu0
        %v597 = vpop.f32.mrb[0].mxu0
        %v598 = vadd.f32 0.0, %v597
        %v599 = vpop.f32.mrb[0].mxu0
        %600 = vmatprep.mubr.bf16.mxu0 0
        %601 = vmatmul.mubr.bf16.gmra.mrb[0].mxu0 %v516
        %v602 = vpop.f32.mrb[0].mxu0
        %v603 = vadd.f32 0.0, %v602
        %v604 = vpop.f32.mrb[0].mxu0
        %v605 = vpop.f32.mrb[0].mxu0
        %v606 = vadd.f32 0.0, %v605
        %v607 = vpop.f32.mrb[0].mxu0
        %608 = vmatprep.mubr.bf16.mxu0 0
        %609 = vmatmul.mubr.bf16.gmra.mrb[0].mxu0 %v519
        %v610 = vpop.f32.mrb[0].mxu0
        %v611 = vadd.f32 0.0, %v610
        %v612 = vpop.f32.mrb[0].mxu0
        %v613 = vpop.f32.mrb[0].mxu0
        %v614 = vadd.f32 0.0, %v613
        %v615 = vpop.f32.mrb[0].mxu0
        %616 = vmatprep.mubr.bf16.mxu0 0
        %617 = vmatmul.mubr.bf16.gmra.mrb[0].mxu0 %v522
        %v618 = vpop.f32.mrb[0].mxu0
        %v619 = vadd.f32 0.0, %v618
        %v620 = vpop.f32.mrb[0].mxu0
        %v621 = vpop.f32.mrb[0].mxu0
        %v622 = vadd.f32 0.0, %v621
        %v623 = vpop.f32.mrb[0].mxu0
        %624 = vmatprep.mubr.bf16.mxu0 0
        %625 = vmatmul.mubr.bf16.gmra.mrb[0].mxu0 %v525
        %v626 = vpop.f32.mrb[0].mxu0
        %v627 = vadd.f32 0.0, %v626
        %v628 = vpop.f32.mrb[0].mxu0
        %v629 = vpop.f32.mrb[0].mxu0
        %v630 = vadd.f32 0.0, %v629
        %v631 = vpop.f32.mrb[0].mxu0
        %632 = vmatprep.mubr.bf16.mxu0 0
        %633 = vmatmul.mubr.bf16.gmra.mrb[0].mxu0 %v528
        %v634 = vpop.f32.mrb[0].mxu0
        %v635 = vadd.f32 0.0, %v634
        %v636 = vpop.f32.mrb[0].mxu0
        %v637 = vpop.f32.mrb[0].mxu0
        %v638 = vadd.f32 0.0, %v637
        %v639 = vpop.f32.mrb[0].mxu0
        %640 = vmatprep.mubr.bf16.mxu0 0
        %641 = vmatmul.mubr.bf16.gmra.mrb[0].mxu0 %v531
        %v642 = vpop.f32.mrb[0].mxu0
        %v643 = vadd.f32 0.0, %v642
        %v644 = vpop.f32.mrb[0].mxu0
        %v645 = vpop.f32.mrb[0].mxu0
        %v646 = vadd.f32 0.0, %v645
        %v647 = vpop.f32.mrb[0].mxu0
        %648 = vmatprep.mubr.bf16.mxu0 0
        %649 = vmatmul.mubr.bf16.gmra.mrb[0].mxu0 %v534
        %v650 = vpop.f32.mrb[0].mxu0
        %v651 = vadd.f32 0.0, %v650
        %v652 = vpop.f32.mrb[0].mxu0
        %v653 = vpop.f32.mrb[0].mxu0
        %v654 = vadd.f32 0.0, %v653
        %v655 = vpop.f32.mrb[0].mxu0
        %656 = vmatprep.mubr.bf16.mxu0 0
        %657 = vmatmul.mubr.bf16.gmra.mrb[0].mxu0 %v537
        %v658 = vpop.f32.mrb[0].mxu0
        %v659 = vadd.f32 0.0, %v658
        %v660 = vpop.f32.mrb[0].mxu0
        %v661 = vpop.f32.mrb[0].mxu0
        %v662 = vadd.f32 0.0, %v661
        %v663 = vpop.f32.mrb[0].mxu0
        %664 = vmatprep.mubr.bf16.mxu0 0
        %665 = vmatmul.mubr.bf16.gmra.mrb[0].mxu0 %v540
        %v666 = vpop.f32.mrb[0].mxu0
        %v667 = vadd.f32 0.0, %v666
        %v668 = vpop.f32.mrb[0].mxu0
        %v669 = vpop.f32.mrb[0].mxu0
        %v670 = vadd.f32 0.0, %v669
        %v671 = vpop.f32.mrb[0].mxu0
        %672 = vmatprep.mubr.bf16.mxu0 0
        %673 = vmatmul.mubr.bf16.gmra.mrb[0].mxu0 %v543
        %v674 = vpop.f32.mrb[0].mxu0
        %v675 = vadd.f32 0.0, %v674
        %v676 = vpop.f32.mrb[0].mxu0
        %v677 = vpop.f32.mrb[0].mxu0
        %v678 = vadd.f32 0.0, %v677
        %v679 = vpop.f32.mrb[0].mxu0
        %680 = vmatprep.mubr.bf16.mxu0 0
        %681 = vmatmul.mubr.bf16.gmra.mrb[0].mxu0 %v546
        %v682 = vpop.f32.mrb[0].mxu0
        %v683 = vadd.f32 0.0, %v682
        %v684 = vpop.f32.mrb[0].mxu0
        %v685 = vpop.f32.mrb[0].mxu0
        %v686 = vadd.f32 0.0, %v685
        %v687 = vpop.f32.mrb[0].mxu0
        %688 = vmatprep.mubr.bf16.mxu0 0
        %689 = vmatmul.mubr.bf16.gmra.mrb[0].mxu0 %v549
        %v690 = vpop.f32.mrb[0].mxu0
        %v691 = vadd.f32 0.0, %v690
        %v692 = vpop.f32.mrb[0].mxu0
        %v693 = vpop.f32.mrb[0].mxu0
        %v694 = vadd.f32 0.0, %v693
        %v695 = vpop.f32.mrb[0].mxu0
        %696 = vmatprep.mubr.bf16.mxu0 0
        %697 = vmatmul.mubr.bf16.gmra.mrb[0].mxu0 %v552
        %v698 = vpop.f32.mrb[0].mxu0
        %v699 = vadd.f32 0.0, %v698
        %v700 = vpop.f32.mrb[0].mxu0
        %v701 = vpop.f32.mrb[0].mxu0
        %v702 = vadd.f32 0.0, %v701
        %v703 = vpop.f32.mrb[0].mxu0
        %704 = vmatprep.mubr.bf16.mxu0 0
        %705 = vmatmul.mubr.bf16.gmra.mrb[0].mxu0 %v555
        %v706 = vpop.f32.mrb[0].mxu0
        %v707 = vadd.f32 0.0, %v706
        %v708 = vpop.f32.mrb[0].mxu0
        %v709 = vpop.f32.mrb[0].mxu0
        %v710 = vadd.f32 0.0, %v709
        %v711 = vpop.f32.mrb[0].mxu0
        %712 = vmatprep.mubr.bf16.mxu0 0
        %713 = vmatmul.mubr.bf16.gmra.mrb[0].mxu0 %v558
        %v714 = vpop.f32.mrb[0].mxu0
        %v715 = vadd.f32 0.0, %v714
        %v716 = vpop.f32.mrb[0].mxu0
        %v717 = vpop.f32.mrb[0].mxu0
        %v718 = vadd.f32 0.0, %v717
        %v719 = vpop.f32.mrb[0].mxu0
        %720 = vdwg.mxu0
        %v721 = vld [vmem:[%s4] sm:$0x1]
        %v723 = vlaneseq
        %v724 = vshrl.u32 %v723, 7
        %v725 = vsub.s32 0, %v724
        %v726 = vrot.slane %v721, %v725
        %v728 = vmul.f32 %v595, %v726
        %v729 = vmul.f32 %v598, %v726
        %v730 = vmul.f32 %v603, %v726
        %v731 = vmul.f32 %v606, %v726
        %v732 = vmul.f32 %v611, %v726
        %v733 = vmul.f32 %v614, %v726
        %v734 = vmul.f32 %v619, %v726
        %v735 = vmul.f32 %v622, %v726
        %v736 = vmul.f32 %v627, %v726
        %v737 = vmul.f32 %v630, %v726
        %v738 = vmul.f32 %v635, %v726
        %v739 = vmul.f32 %v638, %v726
        %v740 = vmul.f32 %v643, %v726
        %v741 = vmul.f32 %v646, %v726
        %v742 = vmul.f32 %v651, %v726
        %v743 = vmul.f32 %v654, %v726
        %v744 = vmul.f32 %v659, %v726
        %v745 = vmul.f32 %v662, %v726
        %v746 = vmul.f32 %v667, %v726
        %v747 = vmul.f32 %v670, %v726
        %v748 = vmul.f32 %v675, %v726
        %v749 = vmul.f32 %v678, %v726
        %v750 = vmul.f32 %v683, %v726
        %v751 = vmul.f32 %v686, %v726
        %v752 = vmul.f32 %v691, %v726
        %v753 = vmul.f32 %v694, %v726
        %v754 = vmul.f32 %v699, %v726
        %v755 = vmul.f32 %v702, %v726
        %v756 = vmul.f32 %v707, %v726
        %v757 = vmul.f32 %v710, %v726
        %v758 = vmul.f32 %v715, %v726
        %v759 = vmul.f32 %v718, %v726
        %v760 = vld [vmem:[%s5] sm:$0x1]
        %v762 = vlaneseq
        %v763 = vshrl.u32 %v762, 7
        %v764 = vsub.s32 0, %v763
        %v765 = vrot.slane %v760, %v764
        %v767 = vadd.f32 %v728, %v765
        %v768 = vadd.f32 %v729, %v765
        %v769 = vadd.f32 %v730, %v765
        %v770 = vadd.f32 %v731, %v765
        %v771 = vadd.f32 %v732, %v765
        %v772 = vadd.f32 %v733, %v765
        %v773 = vadd.f32 %v734, %v765
        %v774 = vadd.f32 %v735, %v765
        %v775 = vadd.f32 %v736, %v765
        %v776 = vadd.f32 %v737, %v765
        %v777 = vadd.f32 %v738, %v765
        %v778 = vadd.f32 %v739, %v765
        %v779 = vadd.f32 %v740, %v765
        %v780 = vadd.f32 %v741, %v765
        %v781 = vadd.f32 %v742, %v765
        %v782 = vadd.f32 %v743, %v765
        %v783 = vadd.f32 %v744, %v765
        %v784 = vadd.f32 %v745, %v765
        %v785 = vadd.f32 %v746, %v765
        %v786 = vadd.f32 %v747, %v765
        %v787 = vadd.f32 %v748, %v765
        %v788 = vadd.f32 %v749, %v765
        %v789 = vadd.f32 %v750, %v765
        %v790 = vadd.f32 %v751, %v765
        %v791 = vadd.f32 %v752, %v765
        %v792 = vadd.f32 %v753, %v765
        %v793 = vadd.f32 %v754, %v765
        %v794 = vadd.f32 %v755, %v765
        %v795 = vadd.f32 %v756, %v765
        %v796 = vadd.f32 %v757, %v765
        %v797 = vadd.f32 %v758, %v765
        %v798 = vadd.f32 %v759, %v765
        %v799 = vmax.f32 %v767, 0.0
        %v800 = vmax.f32 %v768, 0.0
        %v801 = vmax.f32 %v769, 0.0
        %v802 = vmax.f32 %v770, 0.0
        %v803 = vmax.f32 %v771, 0.0
        %v804 = vmax.f32 %v772, 0.0
        %v805 = vmax.f32 %v773, 0.0
        %v806 = vmax.f32 %v774, 0.0
        %v807 = vmax.f32 %v775, 0.0
        %v808 = vmax.f32 %v776, 0.0
        %v809 = vmax.f32 %v777, 0.0
        %v810 = vmax.f32 %v778, 0.0
        %v811 = vmax.f32 %v779, 0.0
        %v812 = vmax.f32 %v780, 0.0
        %v813 = vmax.f32 %v781, 0.0
        %v814 = vmax.f32 %v782, 0.0
        %v815 = vmax.f32 %v783, 0.0
        %v816 = vmax.f32 %v784, 0.0
        %v817 = vmax.f32 %v785, 0.0
        %v818 = vmax.f32 %v786, 0.0
        %v819 = vmax.f32 %v787, 0.0
        %v820 = vmax.f32 %v788, 0.0
        %v821 = vmax.f32 %v789, 0.0
        %v822 = vmax.f32 %v790, 0.0
        %v823 = vmax.f32 %v791, 0.0
        %v824 = vmax.f32 %v792, 0.0
        %v825 = vmax.f32 %v793, 0.0
        %v826 = vmax.f32 %v794, 0.0
        %v827 = vmax.f32 %v795, 0.0
        %v828 = vmax.f32 %v796, 0.0
        %v829 = vmax.f32 %v797, 0.0
        %v830 = vmax.f32 %v798, 0.0
        %v831 = vpack.c.bf16 %v800, %v799
        %v832 = vpack.c.bf16 %v802, %v801
        %v833 = vpack.c.bf16 %v804, %v803
        %v834 = vpack.c.bf16 %v806, %v805
        %v835 = vpack.c.bf16 %v808, %v807
        %v836 = vpack.c.bf16 %v810, %v809
        %v837 = vpack.c.bf16 %v812, %v811
        %v838 = vpack.c.bf16 %v814, %v813
        %v839 = vpack.c.bf16 %v816, %v815
        %v840 = vpack.c.bf16 %v818, %v817
        %v841 = vpack.c.bf16 %v820, %v819
        %v842 = vpack.c.bf16 %v822, %v821
        %v843 = vpack.c.bf16 %v824, %v823
        %v844 = vpack.c.bf16 %v826, %v825
        %v845 = vpack.c.bf16 %v828, %v827
        %v846 = vpack.c.bf16 %v830, %v829
        %v863 = vunpack.c.l.b16 %v831
        %v864 = vunpack.c.h.b16 %v831
        %v865 = vunpack.c.l.b16 %v832
        %v866 = vunpack.c.h.b16 %v832
        %v867 = vunpack.c.l.b16 %v833
        %v868 = vunpack.c.h.b16 %v833
        %v869 = vunpack.c.l.b16 %v834
        %v870 = vunpack.c.h.b16 %v834
        %v871 = vunpack.c.l.b16 %v835
        %v872 = vunpack.c.h.b16 %v835
        %v873 = vunpack.c.l.b16 %v836
        %v874 = vunpack.c.h.b16 %v836
        %v875 = vunpack.c.l.b16 %v837
        %v876 = vunpack.c.h.b16 %v837
        %v877 = vunpack.c.l.b16 %v838
        %v878 = vunpack.c.h.b16 %v838
        %v879 = vunpack.c.l.b16 %v839
        %v880 = vunpack.c.h.b16 %v839
        %v881 = vunpack.c.l.b16 %v840
        %v882 = vunpack.c.h.b16 %v840
        %v883 = vunpack.c.l.b16 %v841
        %v884 = vunpack.c.h.b16 %v841
        %v885 = vunpack.c.l.b16 %v842
        %v886 = vunpack.c.h.b16 %v842
        %v887 = vunpack.c.l.b16 %v843
        %v888 = vunpack.c.h.b16 %v843
        %v889 = vunpack.c.l.b16 %v844
        %v890 = vunpack.c.h.b16 %v844
        %v891 = vunpack.c.l.b16 %v845
        %v892 = vunpack.c.h.b16 %v845
        %v893 = vunpack.c.l.b16 %v846
        %v894 = vunpack.c.h.b16 %v846
        %v895 = vpack.c.b16 %v863, %v863
        %v896 = vpack.c.b16 %v864, %v864
        %v897 = vpack.c.b16 %v865, %v865
        %v898 = vpack.c.b16 %v866, %v866
        %v899 = vpack.c.b16 %v867, %v867
        %v900 = vpack.c.b16 %v868, %v868
        %v901 = vpack.c.b16 %v869, %v869
        %v902 = vpack.c.b16 %v870, %v870
        %v903 = vpack.c.b16 %v871, %v871
        %v904 = vpack.c.b16 %v872, %v872
        %v905 = vpack.c.b16 %v873, %v873
        %v906 = vpack.c.b16 %v874, %v874
        %v907 = vpack.c.b16 %v875, %v875
        %v908 = vpack.c.b16 %v876, %v876
        %v909 = vpack.c.b16 %v877, %v877
        %v910 = vpack.c.b16 %v878, %v878
        %v911 = vpack.c.b16 %v879, %v879
        %v912 = vpack.c.b16 %v880, %v880
        %v913 = vpack.c.b16 %v881, %v881
        %v914 = vpack.c.b16 %v882, %v882
        %v915 = vpack.c.b16 %v883, %v883
        %v916 = vpack.c.b16 %v884, %v884
        %v917 = vpack.c.b16 %v885, %v885
        %v918 = vpack.c.b16 %v886, %v886
        %v919 = vpack.c.b16 %v887, %v887
        %v920 = vpack.c.b16 %v888, %v888
        %v921 = vpack.c.b16 %v889, %v889
        %v922 = vpack.c.b16 %v890, %v890
        %v923 = vpack.c.b16 %v891, %v891
        %v924 = vpack.c.b16 %v892, %v892
        %v925 = vpack.c.b16 %v893, %v893
        %v926 = vpack.c.b16 %v894, %v894
        %vm959 = vcmask 125952
        %960 = vst.msk [vmem:[%s271] sm:$0xf] %vm959, %v895
        %961 = vst.msk [vmem:[%s271 + $0x4] sm:$0xf] %vm959, %v896
        %962 = vst.msk [vmem:[%s271 + $0x8] sm:$0xf] %vm959, %v897
        %963 = vst.msk [vmem:[%s271 + $0xc] sm:$0xf] %vm959, %v898
        %964 = vst.msk [vmem:[%s271 + $0x10] sm:$0xf] %vm959, %v899
        %965 = vst.msk [vmem:[%s271 + $0x14] sm:$0xf] %vm959, %v900
        %966 = vst.msk [vmem:[%s271 + $0x18] sm:$0xf] %vm959, %v901
        %967 = vst.msk [vmem:[%s271 + $0x1c] sm:$0xf] %vm959, %v902
        %968 = vst.msk [vmem:[%s271 + $0x20] sm:$0xf] %vm959, %v903
        %969 = vst.msk [vmem:[%s271 + $0x24] sm:$0xf] %vm959, %v904
        %970 = vst.msk [vmem:[%s271 + $0x28] sm:$0xf] %vm959, %v905
        %971 = vst.msk [vmem:[%s271 + $0x2c] sm:$0xf] %vm959, %v906
        %972 = vst.msk [vmem:[%s271 + $0x30] sm:$0xf] %vm959, %v907
        %973 = vst.msk [vmem:[%s271 + $0x34] sm:$0xf] %vm959, %v908
        %974 = vst.msk [vmem:[%s271 + $0x38] sm:$0xf] %vm959, %v909
        %975 = vst.msk [vmem:[%s271 + $0x3c] sm:$0xf] %vm959, %v910
        %976 = vst.msk [vmem:[%s271 + $0x40] sm:$0xf] %vm959, %v911
        %977 = vst.msk [vmem:[%s271 + $0x44] sm:$0xf] %vm959, %v912
        %978 = vst.msk [vmem:[%s271 + $0x48] sm:$0xf] %vm959, %v913
        %979 = vst.msk [vmem:[%s271 + $0x4c] sm:$0xf] %vm959, %v914
        %980 = vst.msk [vmem:[%s271 + $0x50] sm:$0xf] %vm959, %v915
        %981 = vst.msk [vmem:[%s271 + $0x54] sm:$0xf] %vm959, %v916
        %982 = vst.msk [vmem:[%s271 + $0x58] sm:$0xf] %vm959, %v917
        %983 = vst.msk [vmem:[%s271 + $0x5c] sm:$0xf] %vm959, %v918
        %984 = vst.msk [vmem:[%s271 + $0x60] sm:$0xf] %vm959, %v919
        %985 = vst.msk [vmem:[%s271 + $0x64] sm:$0xf] %vm959, %v920
        %986 = vst.msk [vmem:[%s271 + $0x68] sm:$0xf] %vm959, %v921
        %987 = vst.msk [vmem:[%s271 + $0x6c] sm:$0xf] %vm959, %v922
        %988 = vst.msk [vmem:[%s271 + $0x70] sm:$0xf] %vm959, %v923
        %989 = vst.msk [vmem:[%s271 + $0x74] sm:$0xf] %vm959, %v924
        %990 = vst.msk [vmem:[%s271 + $0x78] sm:$0xf] %vm959, %v925
        %991 = vst.msk [vmem:[%s271 + $0x7c] sm:$0xf] %vm959, %v926
        %p992 = scmp.lt.s32.totalorder %s20, 1
        %s993 = scalar_select %p992, %s20, 1
        %s994 = smul.addr %s993, 32
        %s995 = smul.addr %s994, 4
        %s996 = scalar_lea.vmem %s6, %s995
        // Predicated region
        $region49: #{tpu_custom_call.1} parent=43 // pred_check
          %p997 = pneg %p169
        $region50: #{tpu_custom_call.1} parent=43 // pred_check_branch
          %999 = sbr.rel (%p997) target = $region52
        $region51: #{tpu_custom_call.1} parent=43 // pred_region
          _
        $region52: #{tpu_custom_call.1} parent=43 // pred_fallthru
          _
      $region44: #{tpu_custom_call.1} parent=5 // pred_fallthru
        _
      %p1000 = scmp.le.s32.totalorder 2, %s15
      // Predicated region
      $region53: #{tpu_custom_call.1} parent=5 // pred_check
        %p1001 = pneg %p1000
      $region54: #{tpu_custom_call.1} parent=5 // pred_check_branch
        %1003 = sbr.rel (%p1001) target = $region56
      $region55: #{tpu_custom_call.1} parent=5 // pred_region
        %s1004 = ssub.s32 %s15, 2
        // Predicated region
        $region57: #{tpu_custom_call.1} parent=55 // pred_check
          %p1005 = pneg %p175
        $region58: #{tpu_custom_call.1} parent=55 // pred_check_branch
          %1007 = sbr.rel (%p1005) target = $region60
        $region59: #{tpu_custom_call.1} parent=55 // pred_region
          %p1008 = scmp.lt.s32.totalorder %s21, 1
          %s1009 = scalar_select %p1008, %s21, 1
          %s1010 = smul.addr %s1009, 32
          %s1011 = smul.addr %s1010, 4
          %s1012 = scalar_lea.vmem %s6, %s1011
        $region60: #{tpu_custom_call.1} parent=55 // pred_fallthru
          _
      $region56: #{tpu_custom_call.1} parent=5 // pred_fallthru
        _
    $region6: #{tpu_custom_call.1} parent=1 // loop_footer
      %s19 = sadd.s32 1, %s15
    $region7: #{tpu_custom_call.1} parent=1 // loop_footer_branch
      %14 = sbr.rel target = $region3
    $region8: #{tpu_custom_call.1} parent=1 // loop_exit
      _
    %1013 = vsyncpa [#allocation3], 1
    %s1014 = scalar_lea.sflag [#allocation3], 1
    %1015 = vsyncpa %s1014, 1

</llo_original>
